<compile_context>
chip_gen: v5e
topology: v5e:2x2
jax: 0.10.0
libtpu: 0.0.40
codegen_flags: <defaults>
</compile_context>

<pallas_src>
import functools

import jax
import jax.numpy as jnp
from jax.experimental import pallas as pl
from jax.experimental.pallas import tpu as pltpu


_TARGET_TILE_BYTES = 2 * 1024 * 1024  # per-input-stream tile target (f32 bytes)


def _choose_tiling(rows, hw, target_tile_bytes):
    """Pick a row-tile TM. Prefers tiles that divide `rows` exactly (no padding copy)."""
    bytes_per_row = hw * 4
    tm_cap = max(8, (target_tile_bytes // bytes_per_row) // 8 * 8)
    if rows <= tm_cap:
        return rows, 1                       # single block covering the full row dim
    for tm in range(tm_cap, 7, -8):          # largest multiple-of-8 divisor of rows
        if rows % tm == 0:
            return tm, rows // tm
    tm = tm_cap                              # fallback: pad rows (one extra HBM copy)
    return tm, -(-rows // tm)


def _joints_mse_kernel_w(pred_ref, gt_ref, w2_ref, out_ref, acc_ref, *, scale):
    # pred_ref/gt_ref: (TM, HW); w2_ref: (TM, 1); out_ref: (1, 1) SMEM; acc_ref: (TM, 1) VMEM.
    i = pl.program_id(1)

    @pl.when(i == 0)
    def _init():
        acc_ref[...] = jnp.zeros_like(acc_ref)

    diff = pred_ref[...].astype(jnp.float32) - gt_ref[...].astype(jnp.float32)
    row_sq = jnp.sum(diff * diff, axis=1, keepdims=True)        # (TM, 1), lane reduce (XLU)
    acc_ref[...] += w2_ref[...] * row_sq

    @pl.when(i == pl.num_programs(1) - 1)
    def _finalize():
        out_ref[0, 0] = jnp.sum(acc_ref[...]) * scale


def _joints_mse_kernel_nw(pred_ref, gt_ref, out_ref, acc_ref, *, scale):
    i = pl.program_id(1)

    @pl.when(i == 0)
    def _init():
        acc_ref[...] = jnp.zeros_like(acc_ref)

    diff = pred_ref[...].astype(jnp.float32) - gt_ref[...].astype(jnp.float32)
    acc_ref[...] += jnp.sum(diff * diff, axis=1, keepdims=True)

    @pl.when(i == pl.num_programs(1) - 1)
    def _finalize():
        out_ref[0, 0] = jnp.sum(acc_ref[...]) * scale


def joints_mse_loss(output, target, target_weight, use_target_weight=True,
                    target_tile_bytes=_TARGET_TILE_BYTES):
    """output, target: (B, J, H, W); target_weight: (B, J, 1)."""
    B, J, H, W = output.shape
    HW = H * W
    rows = B * J

    # Free, contiguous reshapes; no transpose, no dtype cast in HBM.
    pred = output.reshape(rows, HW)
    gt = target.reshape(rows, HW)

    tm, n_blocks = _choose_tiling(rows, HW, target_tile_bytes)
    num_splits = 2 if (n_blocks >= 2 and n_blocks % 2 == 0) else 1
    steps = n_blocks // num_splits
    rows_padded = tm * n_blocks
    if rows_padded != rows:  # rare fallback; zero rows contribute zero to the sum
        pad = rows_padded - rows
        pred = jnp.pad(pred, ((0, pad), (0, 0)))
        gt = jnp.pad(gt, ((0, pad), (0, 0)))

    scale = 0.5 / float(J * B * HW)

    row_spec = pl.BlockSpec((tm, HW), lambda p, i: (p * steps + i, 0))
    out_spec = pl.BlockSpec((1, 1), lambda p, i: (p, 0),
                            memory_space=pltpu.MemorySpace.SMEM)

    if use_target_weight:
        w = target_weight.reshape(B, J, -1)[:, :, 0].astype(jnp.float32)
        w2 = (w * w).reshape(rows, 1)
        if rows_padded != rows:
            w2 = jnp.pad(w2, ((0, rows_padded - rows), (0, 0)))
        kernel = functools.partial(_joints_mse_kernel_w, scale=scale)
        in_specs = [row_spec, row_spec,
                    pl.BlockSpec((tm, 1), lambda p, i: (p * steps + i, 0))]
        args = (pred, gt, w2)
    else:
        kernel = functools.partial(_joints_mse_kernel_nw, scale=scale)
        in_specs = [row_spec, row_spec]
        args = (pred, gt)

    partials = pl.pallas_call(
        kernel,
        out_shape=jax.ShapeDtypeStruct((num_splits, 1), jnp.float32),
        grid_spec=pltpu.PrefetchScalarGridSpec(
            num_scalar_prefetch=0,
            grid=(num_splits, steps),
            in_specs=in_specs,
            out_specs=out_spec,
            scratch_shapes=[pltpu.VMEM((tm, 1), jnp.float32)],
        ),
        compiler_params=pltpu.CompilerParams(
            dimension_semantics=("parallel", "arbitrary"),
        ),
    )(*args)
    return jnp.sum(partials)


def joints_mse_loss_ref(output, target, target_weight, use_target_weight=True):
    """Pure-JAX reference mirroring the PyTorch forward exactly."""
    B, J, _, _ = output.shape
    p = output.reshape(B, J, -1).astype(jnp.float32)
    g = target.reshape(B, J, -1).astype(jnp.float32)
    loss = 0.0
    for idx in range(J):
        hp = p[:, idx, :]
        hg = g[:, idx, :]
        if use_target_weight:
            wj = target_weight[:, idx].astype(jnp.float32)  # (B, 1)
            hp = hp * wj
            hg = hg * wj
        loss = loss + 0.5 * jnp.mean((hp - hg) ** 2)
    return loss / J


def _check(B, J, H, W, key, use_target_weight, target_tile_bytes=_TARGET_TILE_BYTES):
    k1, k2, k3 = jax.random.split(key, 3)
    output = jax.random.normal(k1, (B, J, H, W), dtype=jnp.float32)
    target = jax.random.normal(k2, (B, J, H, W), dtype=jnp.float32)
    target_weight = jax.random.uniform(k3, (B, J, 1), dtype=jnp.float32)

    loss = joints_mse_loss(output, target, target_weight,
                           use_target_weight=use_target_weight,
                           target_tile_bytes=target_tile_bytes)
    loss = jax.block_until_ready(loss)
    ref = joints_mse_loss_ref(output, target, target_weight,
                              use_target_weight=use_target_weight)
    assert jnp.allclose(loss, ref, rtol=1e-5, atol=1e-6), (loss, ref)


if __name__ == "__main__":
    key = jax.random.PRNGKey(0)
    keys = jax.random.split(key, 4)

    # Main case: single-block path, with target weights.
    _check(2, 4, 16, 16, keys[0], use_target_weight=True)
    # No-weight kernel variant.
    _check(2, 4, 16, 16, keys[1], use_target_weight=False)
    # Multi-block + 2-way parallel split path (small target tile to force it).
    _check(2, 16, 32, 32, keys[2], use_target_weight=True, target_tile_bytes=64 * 1024)
    # Row-padding fallback path.
    _check(2, 9, 32, 32, keys[3], use_target_weight=True, target_tile_bytes=64 * 1024)

    print("KERNEL_OK")
</pallas_src>

<mosaic_0001>
module attributes {stable_mosaic.version = 11 : i64} {
  func.func @_joints_mse_kernel_w(%arg0: i32, %arg1: i32, %arg2: memref<8x256xf32, #tpu.memory_space<vmem>>, %arg3: memref<8x256xf32, #tpu.memory_space<vmem>>, %arg4: memref<8x1xf32, #tpu.memory_space<vmem>>, %arg5: memref<1x1xf32, #tpu.memory_space<smem>>, %arg6: memref<8x1xf32, #tpu.memory_space<vmem>>) attributes {dimension_semantics = [#tpu.dimension_semantics<parallel>, #tpu.dimension_semantics<arbitrary>], iteration_bounds = array<i64: 1, 1>, scalar_prefetch = 0 : i64, scratch_operands = 1 : i64, tpu.core_type = #tpu.core_type<tc>, window_params = [{transform_indices = @transform_0, window_bounds = array<i64: 8, 256>}, {transform_indices = @transform_1, window_bounds = array<i64: 8, 256>}, {transform_indices = @transform_2, window_bounds = array<i64: 8, 1>}, {transform_indices = @transform_3, window_bounds = array<i64: 1, 1>}]} {
    %c0_i32 = arith.constant 0 : i32
    %0 = arith.cmpi eq, %arg1, %c0_i32 : i32
    %1 = arith.extui %0 : i1 to i32
    %c0_i32_0 = arith.constant 0 : i32
    %2 = arith.cmpi ne, %1, %c0_i32_0 : i32
    scf.if %2 {
      %cst_12 = arith.constant 0.000000e+00 : f32
      %17 = vector.broadcast %cst_12 : f32 to vector<8x1xf32>
      %c0_13 = arith.constant 0 : index
      %c0_14 = arith.constant 0 : index
      %18 = vector.load %arg6[%c0_13, %c0_14] : memref<8x1xf32, #tpu.memory_space<vmem>>, vector<8x1xf32>
      tpu.vector_store %arg6[%c0_13, %c0_14], %17 {strides = array<i32>} : memref<8x1xf32, #tpu.memory_space<vmem>>, vector<8x1xf32>,
    } else {
    }
    %c0 = arith.constant 0 : index
    %c0_1 = arith.constant 0 : index
    %3 = vector.load %arg2[%c0, %c0_1] : memref<8x256xf32, #tpu.memory_space<vmem>>, vector<8x256xf32>
    %c0_2 = arith.constant 0 : index
    %c0_3 = arith.constant 0 : index
    %4 = vector.load %arg3[%c0_2, %c0_3] : memref<8x256xf32, #tpu.memory_space<vmem>>, vector<8x256xf32>
    %5 = arith.subf %3, %4 : vector<8x256xf32>
    %6 = arith.mulf %5, %5 : vector<8x256xf32>
    %cst = arith.constant dense<0.000000e+00> : vector<8xf32>
    %7 = vector.multi_reduction <add>, %6, %cst [1] : vector<8x256xf32> to vector<8xf32>
    %8 = vector.shape_cast %7 : vector<8xf32> to vector<8x1xf32>
    %c0_4 = arith.constant 0 : index
    %c0_5 = arith.constant 0 : index
    %9 = vector.load %arg6[%c0_4, %c0_5] : memref<8x1xf32, #tpu.memory_space<vmem>>, vector<8x1xf32>
    %c0_6 = arith.constant 0 : index
    %c0_7 = arith.constant 0 : index
    %10 = vector.load %arg4[%c0_6, %c0_7] : memref<8x1xf32, #tpu.memory_space<vmem>>, vector<8x1xf32>
    %11 = arith.mulf %10, %8 : vector<8x1xf32>
    %12 = arith.addf %9, %11 : vector<8x1xf32>
    %c0_8 = arith.constant 0 : index
    %c0_9 = arith.constant 0 : index
    %13 = vector.load %arg6[%c0_8, %c0_9] : memref<8x1xf32, #tpu.memory_space<vmem>>, vector<8x1xf32>
    tpu.vector_store %arg6[%c0_8, %c0_9], %12 {strides = array<i32>} : memref<8x1xf32, #tpu.memory_space<vmem>>, vector<8x1xf32>,
    %c0_i32_10 = arith.constant 0 : i32
    %14 = arith.cmpi eq, %arg1, %c0_i32_10 : i32
    %15 = arith.extui %14 : i1 to i32
    %c0_i32_11 = arith.constant 0 : i32
    %16 = arith.cmpi ne, %15, %c0_i32_11 : i32
    scf.if %16 {
      %c0_12 = arith.constant 0 : index
      %c0_13 = arith.constant 0 : index
      %17 = vector.load %arg6[%c0_12, %c0_13] : memref<8x1xf32, #tpu.memory_space<vmem>>, vector<8x1xf32>
      %18 = vector.shape_cast %17 : vector<8x1xf32> to vector<1x8x1xf32>
      %cst_14 = arith.constant dense<0.000000e+00> : vector<1xf32>
      %19 = vector.multi_reduction <add>, %18, %cst_14 [1, 2] : vector<1x8x1xf32> to vector<1xf32>
      %20 = vector.shape_cast %19 : vector<1xf32> to vector<1x1x1xf32>
      %21 = vector.extract %20[0, 0, 0] : f32 from vector<1x1x1xf32>
      %cst_15 = arith.constant 2.44140625E-4 : f32
      %22 = arith.mulf %21, %cst_15 : f32
      %c0_16 = arith.constant 0 : index
      %c0_17 = arith.constant 0 : index
      %23 = memref.load %arg5[%c0_16, %c0_17] : memref<1x1xf32, #tpu.memory_space<smem>>
      memref.store %22, %arg5[%c0_16, %c0_17] : memref<1x1xf32, #tpu.memory_space<smem>>
    } else {
    }
    return
  }
  func.func @transform_0(%arg0: i32, %arg1: i32) -> (i32, i32) {
    %c1_i32 = arith.constant 1 : i32
    %0 = arith.muli %arg0, %c1_i32 : i32
    %1 = arith.addi %0, %arg1 : i32
    %c0_i32 = arith.constant 0 : i32
    %c0_i32_0 = arith.constant 0 : i32
    return %1, %c0_i32 : i32, i32
  }
  func.func @transform_1(%arg0: i32, %arg1: i32) -> (i32, i32) {
    %c1_i32 = arith.constant 1 : i32
    %0 = arith.muli %arg0, %c1_i32 : i32
    %1 = arith.addi %0, %arg1 : i32
    %c0_i32 = arith.constant 0 : i32
    %c0_i32_0 = arith.constant 0 : i32
    return %1, %c0_i32 : i32, i32
  }
  func.func @transform_2(%arg0: i32, %arg1: i32) -> (i32, i32) {
    %c1_i32 = arith.constant 1 : i32
    %0 = arith.muli %arg0, %c1_i32 : i32
    %1 = arith.addi %0, %arg1 : i32
    %c0_i32 = arith.constant 0 : i32
    %c0_i32_0 = arith.constant 0 : i32
    return %1, %c0_i32 : i32, i32
  }
  func.func @transform_3(%arg0: i32, %arg1: i32) -> (i32, i32) {
    %c0_i32 = arith.constant 0 : i32
    %c0_i32_0 = arith.constant 0 : i32
    return %arg0, %c0_i32 : i32, i32
  }
}

</mosaic_0001>

<llo_original>
// kernel: tpu_custom_call.1
$region0: #{tpu_custom_call.1}
  #allocation0 [shape = 'u32[]', space=smem, size = 0x4, offset = 0x4, fixed_abs, tag = 'smem constant byte address 0x4 - core index']
  #allocation1 [shape = 'u32[72,128]{1,0:T(1,128)}', space=vmem, size = 0x9000, scoped, tag = 'internal scratch']
  #allocation2 [shape = 'f32[8,1]{1,0:T(8,128)}', space=vmem, size = 0x1000, scoped, tag = 'scratch operand']
  %s0 = inlined_call_operand.hbm [shape: f32[8,256], index: 0, kind: input, shape index: {}]
  %s1 = inlined_call_operand.hbm [shape: f32[8,256], index: 1, kind: input, shape index: {}]
  %s2 = inlined_call_operand.vmem [shape: f32[8,1], index: 2, kind: input, shape index: {}]
  %s3 = inlined_call_operand.hbm [shape: f32[1,1], index: 3, kind: output, shape index: {}]
  %s4 = sld [smem:[#allocation0]]
  $region38: #{tpu_custom_call.1} parent=0
    _
  %s6 = ssub.s32 1, %s4
  %s7 = scalar_select 0, %s6, %s4
  $region1: #{tpu_custom_call.1} parent=0
    #allocation3 [shape = 'u8[8192]{0}', space=vmem, size = 0x2000, scoped, tag = 'input window, operand 0, single buffered']
    #allocation4 [shape = 's32[1]{0}', space=sflag, size = 0x4, scoped, tag = 'scoped memory for tpu_custom_call.1']
    #allocation5 [shape = 's32[1]{0}', space=sflag, size = 0x4, scoped, tag = 'scoped memory for tpu_custom_call.1']
    #allocation6 [shape = 'u8[8192]{0}', space=vmem, size = 0x2000, scoped, tag = 'input window, operand 1, single buffered']
    #allocation7 [shape = 's32[1]{0}', space=sflag, size = 0x4, scoped, tag = 'scoped memory for tpu_custom_call.1']
    #allocation8 [shape = 'u8[512]{0}', space=smem, size = 0x200, scoped, tag = 'output window, operand 0, single buffered']
    %8 = vsyncpa [#allocation4], 0
    %9 = vsyncpa [#allocation7], 0
    %10 = vsyncpa [#allocation5], 0
    // Predicated region
    $region2: #{tpu_custom_call.1} parent=1 // pred_check
      _
    $region3: #{tpu_custom_call.1} parent=1 // pred_check_branch
      %12 = sbr.rel (0) target = $region5
    $region4: #{tpu_custom_call.1} parent=1 // pred_region
      %s13 = sadd.s32 0, 0
      %15 = vsyncadd [#allocation4], 0
      %s16 = smul.addr %s13, 2
      %s17 = smul.addr %s16, 8
      %s18 = scalar_lea.hbm %s0, %s17
      %s20 = sshll.u32 %s18, 4
      %s21 = int_to_ptr.hbm [resolvable:$true] %s20
      %s22 = sshll.u32 [#allocation3], 4
      %s23 = int_to_ptr.vmem [resolvable:$true] %s22
      %25 = dma.hbm_to_vmem [thread:$0]  %s21, 256, %s23, [#allocation4]
    $region5: #{tpu_custom_call.1} parent=1 // pred_fallthru
      _
    // Predicated region
    $region6: #{tpu_custom_call.1} parent=1 // pred_check
      _
    $region7: #{tpu_custom_call.1} parent=1 // pred_check_branch
      %27 = sbr.rel (0) target = $region9
    $region8: #{tpu_custom_call.1} parent=1 // pred_region
      %s28 = sadd.s32 0, 0
      %30 = vsyncadd [#allocation7], 0
      %s31 = smul.addr %s28, 2
      %s32 = smul.addr %s31, 8
      %s33 = scalar_lea.hbm %s1, %s32
      %s35 = sshll.u32 %s33, 4
      %s36 = int_to_ptr.hbm [resolvable:$true] %s35
      %s37 = sshll.u32 [#allocation6], 4
      %s38 = int_to_ptr.vmem [resolvable:$true] %s37
      %40 = dma.hbm_to_vmem [thread:$0]  %s36, 256, %s38, [#allocation7]
    $region9: #{tpu_custom_call.1} parent=1 // pred_fallthru
      _
    // Predicated region
    $region10: #{tpu_custom_call.1} parent=1 // pred_check
      _
    $region11: #{tpu_custom_call.1} parent=1 // pred_check_branch
      %42 = sbr.rel (0) target = $region13
    $region12: #{tpu_custom_call.1} parent=1 // pred_region
      %s43 = sadd.s32 0, 0
      %p44 = scmp.lt.s32.totalorder %s43, 0
      %s45 = scalar_select %p44, %s43, 0
      %s46 = smul.addr %s45, 8
      %s47 = scalar_lea.vmem %s2, %s46
      %s48 = sadd.s32 0, 0
    $region13: #{tpu_custom_call.1} parent=1 // pred_fallthru
      _
    // Predicated region
    $region14: #{tpu_custom_call.1} parent=1 // pred_check
      _
    $region15: #{tpu_custom_call.1} parent=1 // pred_check_branch
      %50 = sbr.rel (0) target = $region17
    $region16: #{tpu_custom_call.1} parent=1 // pred_region
      %52 = dma.done [#allocation4], 256
    $region17: #{tpu_custom_call.1} parent=1 // pred_fallthru
      _
    // Predicated region
    $region18: #{tpu_custom_call.1} parent=1 // pred_check
      _
    $region19: #{tpu_custom_call.1} parent=1 // pred_check_branch
      %54 = sbr.rel (0) target = $region21
    $region20: #{tpu_custom_call.1} parent=1 // pred_region
      %56 = dma.done [#allocation7], 256
    $region21: #{tpu_custom_call.1} parent=1 // pred_fallthru
      _
    %s57 = sadd.s32 0, 0
    %p58 = scmp.lt.s32.totalorder %s57, 0
    %s59 = scalar_select %p58, %s57, 0
    %s60 = smul.addr %s59, 8
    %s61 = scalar_lea.vmem %s2, %s60
    %s62 = sadd.s32 0, 0
    %s63 = sadd.s32 0, 0
    %s64 = sadd.s32 0, 0
    %p65 = scmp.lt.s32.totalorder %s64, 0
    %s66 = scalar_select %p65, %s64, 0
    %s67 = smul.addr %s66, 8
    %s68 = scalar_lea.vmem %s2, %s67
    %s69 = sadd.s32 0, 0
    %p70 = scmp.eq.s32.totalorder 0, 0
    // Predicated region
    $region22: #{tpu_custom_call.1} parent=1 // pred_check
      %p71 = pneg %p70
    $region23: #{tpu_custom_call.1} parent=1 // pred_check_branch
      %73 = sbr.rel (%p71) target = $region25
    $region24: #{tpu_custom_call.1} parent=1 // pred_region
      %vm74 = vcmask 7168
      %75 = vst.msk [vmem:[#allocation2] sm:$0xff] %vm74, 0.0
    $region25: #{tpu_custom_call.1} parent=1 // pred_fallthru
      _
    %v76 = vld [vmem:[#allocation3] sm:$0xff]
    %v77 = vld [vmem:[#allocation3 + $0x8] sm:$0xff]
    %v78 = vld [vmem:[#allocation6] sm:$0xff]
    %v79 = vld [vmem:[#allocation6 + $0x8] sm:$0xff]
    %v80 = vsub.f32 %v76, %v78
    %v81 = vsub.f32 %v77, %v79
    %v82 = vmul.f32 %v80, %v80
    %v83 = vmul.f32 %v81, %v81
    %v84 = vadd.f32 %v82, %v83
    %85 = vadd.xlane.f32.xlu0 %v84
    %v86 = vpop.xlane.xlu0 %85
    %v87 = vld [vmem:[#allocation2] sm:$0xff]
    %v88 = vld [vmem:[%s68] sm:$0xff]
    %v89 = vmul.f32 %v88, %v86
    %v90 = vadd.f32 %v87, %v89
    %vm91 = vcmask 7168
    %92 = vst.msk [vmem:[#allocation2] sm:$0xff] %vm91, %v90
    // Predicated region
    $region26: #{tpu_custom_call.1} parent=1 // pred_check
      %p93 = pneg %p70
    $region27: #{tpu_custom_call.1} parent=1 // pred_check_branch
      %95 = sbr.rel (%p93) target = $region29
    $region28: #{tpu_custom_call.1} parent=1 // pred_region
      %v96 = vld [vmem:[#allocation2] sm:$0xff]
      %v97 = vsel %vm91, %v96, 0.0
      %98 = vadd.xlane.f32.xlu0 %v97
      %v99 = vpop.xlane.xlu0 %98
      %v100 = vrot.slane %v99, 4
      %v101 = vadd.f32 %v99, %v100
      %v102 = vrot.slane %v101, 2
      %v103 = vadd.f32 %v101, %v102
      %v104 = vrot.slane %v103, 1
      %v105 = vadd.f32 %v103, %v104
      %s106 = vtos %v105
      %s107 = smul.f32 %s106, 0.00024414063
      %s108 = scalar_lea.smem [#allocation8], 0
      %109 = sst [smem:[%s108]] %s107
    $region29: #{tpu_custom_call.1} parent=1 // pred_fallthru
      _
    // Predicated region
    $region30: #{tpu_custom_call.1} parent=1 // pred_check
      _
    $region31: #{tpu_custom_call.1} parent=1 // pred_check_branch
      %111 = sbr.rel (0) target = $region33
    $region32: #{tpu_custom_call.1} parent=1 // pred_region
      %113 = vsyncadd [#allocation5], 0
      %s115 = sshll.u32 %s3, 4
      %s116 = int_to_ptr.hbm [resolvable:$true] %s115
      %118 = dma.smem_to_hbm [#allocation8], 16, %s116, [#allocation5]
    $region33: #{tpu_custom_call.1} parent=1 // pred_fallthru
      _
    // Predicated region
    $region34: #{tpu_custom_call.1} parent=1 // pred_check
      _
    $region35: #{tpu_custom_call.1} parent=1 // pred_check_branch
      %120 = sbr.rel (0) target = $region37
    $region36: #{tpu_custom_call.1} parent=1 // pred_region
      %122 = dma.done [#allocation5], 16
    $region37: #{tpu_custom_call.1} parent=1 // pred_fallthru
      _
    %123 = sfence
    %124 = vsyncpa [#allocation4], 1
    %125 = vsyncpa [#allocation7], 1
    %126 = vsyncpa [#allocation5], 1

</llo_original>
